<compile_context>
chip_gen: v6e
topology: v6e:2x2x1
jax: 0.10.0
libtpu: 0.0.40
codegen_flags: <defaults>
</compile_context>

<pallas_src>
import jax
import jax.numpy as jnp
from jax import lax
from jax.experimental import pallas as pl
from jax.experimental.pallas import tpu as pltpu


def basic_block_kernel(x_ref, wb1_ref, s1_ref, b1_ref, wb2_ref, s2_ref, b2_ref,
                       out_ref, xpad_s):
    # x_ref   : (block_n, H, W*C) f32   lane-dense unpadded input block
    # wb*_ref : (3, W*C, W*C)     bf16  banded conv weights (one band per dy)
    # s*/b*   : (1, W*C)          f32   folded BN scale/bias, tiled W times
    # out_ref : (block_n, H, W*C) f32
    # xpad_s  : (H+2, W*C)        f32   row-padded activation scratch (shared
    #                                   by conv1 and conv2)
    nb, h_dim, wc = out_ref.shape

    # Zero only the two halo ROWS (full-width, unmasked stores).  Rows [1, H]
    # are always fully overwritten below, so the halo stays zero across both
    # convs and all images of this block; re-zeroing every grid step keeps
    # this correct under megacore sharding of the "parallel" grid axis.
    xpad_s[0:1, :] = jnp.zeros((1, wc), xpad_s.dtype)
    xpad_s[h_dim + 1:h_dim + 2, :] = jnp.zeros((1, wc), xpad_s.dtype)

    s1 = s1_ref[0]
    b1 = b1_ref[0]
    s2 = s2_ref[0]
    b2 = b2_ref[0]

    def conv3x3(wb_ref):
        # 3 lane-dense MXU dots, one per dy band.  dx shifts and the W-edge
        # zero padding are baked into the banded weights, so the result comes
        # out of the MXU directly as (H, W*C) f32 — no relayout.  Repeated
        # `acc +=` maps onto v7x's in-place MRB accumulation.
        acc = jnp.dot(xpad_s[0:h_dim, :].astype(jnp.bfloat16), wb_ref[0],
                      preferred_element_type=jnp.float32)
        acc += jnp.dot(xpad_s[1:1 + h_dim, :].astype(jnp.bfloat16), wb_ref[1],
                       preferred_element_type=jnp.float32)
        acc += jnp.dot(xpad_s[2:2 + h_dim, :].astype(jnp.bfloat16), wb_ref[2],
                       preferred_element_type=jnp.float32)
        return acc                                          # (H, W*C) f32

    for i in range(nb):                       # static block_n-image loop
        x = x_ref[i]                          # (H, W*C) f32 — also residual

        # conv1 -> bn1 -> relu
        xpad_s[1:1 + h_dim, :] = x            # full-width interior store
        h = conv3x3(wb1_ref)
        h = jnp.maximum(h * s1 + b1, 0.0)

        # conv2 -> bn2 -> + identity -> relu  (same scratch, halo stays zero)
        xpad_s[1:1 + h_dim, :] = h
        o = conv3x3(wb2_ref)
        o = jnp.maximum(o * s2 + b2 + x, 0.0)

        out_ref[i] = o.astype(out_ref.dtype)


def _banded_conv_weights(w_hwio, width, dtype=jnp.bfloat16):
    """Per-dy block-banded weights of shape (3, W*C, W*C).

    band[dy][p*C + cin, w*C + cout] = w[dy, p-w+1, cin, cout] when
    0 <= p-w+1 <= 2, else 0.  The clipped band realises the zero padding at
    the W edges, so the kernel needs no lane halo at all.
    """
    bands = []
    for dy in range(3):
        band = sum(jnp.kron(jnp.eye(width, k=1 - dx, dtype=jnp.float32),
                            w_hwio[dy, dx]) for dx in range(3))
        bands.append(band)
    return jnp.stack(bands).astype(dtype)


def basic_block_pallas(x_nchw, w1, s1, b1, w2, s2, b2, block_n=1):
    N, C, H, W = x_nchw.shape
    WC = W * C
    assert N % block_n == 0, "batch must be divisible by block_n"

    # NCHW -> NHWC -> fuse (W, C) on the lane axis (contiguous, free reshape).
    x = jnp.transpose(x_nchw, (0, 2, 3, 1)).reshape(N, H, WC)

    # Block-banded bf16 conv weights (3 bands per conv).
    wb1 = _banded_conv_weights(w1, W)
    wb2 = _banded_conv_weights(w2, W)

    # Folded BN params tiled along W so they broadcast in the fused layout.
    s1f = jnp.tile(s1.reshape(1, C), (1, W))
    b1f = jnp.tile(b1.reshape(1, C), (1, W))
    s2f = jnp.tile(s2.reshape(1, C), (1, W))
    b2f = jnp.tile(b2.reshape(1, C), (1, W))

    cost = pl.CostEstimate(
        flops=2 * N * 2 * 3 * H * WC * WC,       # MXU work actually issued
        transcendentals=0,
        bytes_accessed=(2 * N * H * WC * 4       # input + output (f32)
                        + 2 * 3 * WC * WC * 2    # banded bf16 weights
                        + 4 * WC * 4))           # BN scale/bias

    # TODO(synk): for realistic ResNet shapes on v6e/v7x, fuse two W-rows (or
    # two images) onto the lane axis so the output is 256 lanes wide and the
    # 256x256 MXU columns are filled; 128 is already optimal for v5e.
    out = pl.pallas_call(
        basic_block_kernel,
        out_shape=jax.ShapeDtypeStruct((N, H, WC), x.dtype),
        grid_spec=pltpu.PrefetchScalarGridSpec(
            num_scalar_prefetch=0,
            grid=(N // block_n,),
            in_specs=[
                pl.BlockSpec((block_n, H, WC), lambda n: (n, 0, 0)),  # x
                pl.BlockSpec((3, WC, WC), lambda n: (0, 0, 0)),       # wb1
                pl.BlockSpec((1, WC), lambda n: (0, 0)),              # s1
                pl.BlockSpec((1, WC), lambda n: (0, 0)),              # b1
                pl.BlockSpec((3, WC, WC), lambda n: (0, 0, 0)),       # wb2
                pl.BlockSpec((1, WC), lambda n: (0, 0)),              # s2
                pl.BlockSpec((1, WC), lambda n: (0, 0)),              # b2
            ],
            out_specs=pl.BlockSpec((block_n, H, WC), lambda n: (n, 0, 0)),
            scratch_shapes=[
                pltpu.VMEM((H + 2, WC), jnp.float32),  # row-padded activations
            ],
        ),
        compiler_params=pltpu.CompilerParams(
            dimension_semantics=("parallel",),
            # Explicit scoped-VMEM limit; safe on v5e/v6e (128 MiB) and within
            # v7x's 64 MiB physical VMEM.  Size block_n against this budget.
            vmem_limit_bytes=32 * 1024 * 1024,
        ),
        cost_estimate=cost,
    )(x, wb1, s1f, b1f, wb2, s2f, b2f)

    # Un-fuse lanes and go back to NCHW.
    return jnp.transpose(out.reshape(N, H, W, C), (0, 3, 1, 2))


def basic_block_reference(x_nchw, w1, s1, b1, w2, s2, b2):
    """Pure-JAX f32 reference (NHWC conv via lax) for correctness checking."""
    x = jnp.transpose(x_nchw, (0, 2, 3, 1))
    dn = ('NHWC', 'HWIO', 'NHWC')
    h = lax.conv_general_dilated(x, w1, window_strides=(1, 1), padding='SAME',
                                 dimension_numbers=dn)
    h = jnp.maximum(h * s1[0] + b1[0], 0.0)
    o = lax.conv_general_dilated(h, w2, window_strides=(1, 1), padding='SAME',
                                 dimension_numbers=dn)
    o = o * s2[0] + b2[0]
    o = jnp.maximum(o + x, 0.0)
    return jnp.transpose(o, (0, 3, 1, 2))


def make_params(key, c):
    """Deterministic synthetic params: conv weights + folded BN scale/bias."""
    eps = 1e-5
    ks = jax.random.split(key, 10)

    def folded_bn(kg, kb, km, kv):
        gamma = jax.random.uniform(kg, (c,), jnp.float32, 0.5, 1.5)
        beta = 0.1 * jax.random.normal(kb, (c,), jnp.float32)
        mean = 0.1 * jax.random.normal(km, (c,), jnp.float32)
        var = jax.random.uniform(kv, (c,), jnp.float32, 0.5, 1.5)
        scale = gamma / jnp.sqrt(var + eps)
        bias = beta - mean * scale
        return scale.reshape(1, c), bias.reshape(1, c)

    w1 = 0.1 * jax.random.normal(ks[0], (3, 3, c, c), jnp.float32)  # HWIO
    w2 = 0.1 * jax.random.normal(ks[1], (3, 3, c, c), jnp.float32)
    s1, b1 = folded_bn(ks[2], ks[3], ks[4], ks[5])
    s2, b2 = folded_bn(ks[6], ks[7], ks[8], ks[9])
    return w1, s1, b1, w2, s2, b2


if __name__ == "__main__":
    key = jax.random.PRNGKey(0)
    k_x, k_x4, k_p = jax.random.split(key, 3)

    # inplanes = planes = 8, stride = 1, no downsample; W*C = 128 (lane-dense)
    N, C, H, W = 2, 8, 16, 16
    x = jax.random.normal(k_x, (N, C, H, W), jnp.float32)   # NCHW like PyTorch
    params = make_params(k_p, C)

    out = basic_block_pallas(x, *params, block_n=1)
    out = jax.block_until_ready(out)
    ref = basic_block_reference(x, *params)
    assert out.shape == (N, C, H, W)
    # bf16 MXU operands (f32 accumulation) vs. an all-f32 reference.
    assert jnp.allclose(out, ref, rtol=5e-2, atol=5e-2), \
        f"max err {jnp.max(jnp.abs(out - ref))}"

    # Exercise the multi-image blocking path (block_n=2, grid still >= 2).
    x4 = jax.random.normal(k_x4, (4, C, H, W), jnp.float32)
    out4 = jax.block_until_ready(basic_block_pallas(x4, *params, block_n=2))
    ref4 = basic_block_reference(x4, *params)
    assert jnp.allclose(out4, ref4, rtol=5e-2, atol=5e-2), \
        f"max err {jnp.max(jnp.abs(out4 - ref4))}"

    print("KERNEL_OK")
</pallas_src>

<mosaic_0001>
module attributes {stable_mosaic.version = 11 : i64} {
  func.func @basic_block_kernel(%arg0: i32, %arg1: memref<1x16x128xf32, #tpu.memory_space<vmem>>, %arg2: memref<3x128x128xbf16, #tpu.memory_space<vmem>>, %arg3: memref<1x128xf32, #tpu.memory_space<vmem>>, %arg4: memref<1x128xf32, #tpu.memory_space<vmem>>, %arg5: memref<3x128x128xbf16, #tpu.memory_space<vmem>>, %arg6: memref<1x128xf32, #tpu.memory_space<vmem>>, %arg7: memref<1x128xf32, #tpu.memory_space<vmem>>, %arg8: memref<1x16x128xf32, #tpu.memory_space<vmem>>, %arg9: memref<18x128xf32, #tpu.memory_space<vmem>>) attributes {dimension_semantics = [#tpu.dimension_semantics<parallel>], iteration_bounds = array<i64: 2>, scalar_prefetch = 0 : i64, scratch_operands = 1 : i64, tpu.core_type = #tpu.core_type<tc>, window_params = [{transform_indices = @transform_0, window_bounds = array<i64: 1, 16, 128>}, {pipeline_mode = #tpu.pipeline_mode<synchronous>, transform_indices = @transform_1, window_bounds = array<i64: 3, 128, 128>}, {pipeline_mode = #tpu.pipeline_mode<synchronous>, transform_indices = @transform_2, window_bounds = array<i64: 1, 128>}, {pipeline_mode = #tpu.pipeline_mode<synchronous>, transform_indices = @transform_3, window_bounds = array<i64: 1, 128>}, {pipeline_mode = #tpu.pipeline_mode<synchronous>, transform_indices = @transform_4, window_bounds = array<i64: 3, 128, 128>}, {pipeline_mode = #tpu.pipeline_mode<synchronous>, transform_indices = @transform_5, window_bounds = array<i64: 1, 128>}, {pipeline_mode = #tpu.pipeline_mode<synchronous>, transform_indices = @transform_6, window_bounds = array<i64: 1, 128>}, {transform_indices = @transform_7, window_bounds = array<i64: 1, 16, 128>}]} {
    %cst = arith.constant 0.000000e+00 : f32
    %0 = vector.broadcast %cst : f32 to vector<1x128xf32>
    %c0 = arith.constant 0 : index
    %c0_0 = arith.constant 0 : index
    %1 = vector.load %arg9[%c0, %c0_0] : memref<18x128xf32, #tpu.memory_space<vmem>>, vector<1x128xf32>
    tpu.vector_store %arg9[%c0, %c0_0], %0 {strides = array<i32>} : memref<18x128xf32, #tpu.memory_space<vmem>>, vector<1x128xf32>,
    %cst_1 = arith.constant 0.000000e+00 : f32
    %2 = vector.broadcast %cst_1 : f32 to vector<1x128xf32>
    %c17 = arith.constant 17 : index
    %c0_2 = arith.constant 0 : index
    %3 = vector.load %arg9[%c17, %c0_2] : memref<18x128xf32, #tpu.memory_space<vmem>>, vector<1x128xf32>
    tpu.vector_store %arg9[%c17, %c0_2], %2 {strides = array<i32>} : memref<18x128xf32, #tpu.memory_space<vmem>>, vector<1x128xf32>,
    %c0_3 = arith.constant 0 : index
    %c0_4 = arith.constant 0 : index
    %4 = vector.load %arg3[%c0_3, %c0_4] : memref<1x128xf32, #tpu.memory_space<vmem>>, vector<1x128xf32>
    %5 = vector.shape_cast %4 : vector<1x128xf32> to vector<128xf32>
    %c0_5 = arith.constant 0 : index
    %c0_6 = arith.constant 0 : index
    %6 = vector.load %arg4[%c0_5, %c0_6] : memref<1x128xf32, #tpu.memory_space<vmem>>, vector<1x128xf32>
    %7 = vector.shape_cast %6 : vector<1x128xf32> to vector<128xf32>
    %c0_7 = arith.constant 0 : index
    %c0_8 = arith.constant 0 : index
    %8 = vector.load %arg6[%c0_7, %c0_8] : memref<1x128xf32, #tpu.memory_space<vmem>>, vector<1x128xf32>
    %9 = vector.shape_cast %8 : vector<1x128xf32> to vector<128xf32>
    %c0_9 = arith.constant 0 : index
    %c0_10 = arith.constant 0 : index
    %10 = vector.load %arg7[%c0_9, %c0_10] : memref<1x128xf32, #tpu.memory_space<vmem>>, vector<1x128xf32>
    %11 = vector.shape_cast %10 : vector<1x128xf32> to vector<128xf32>
    %c0_11 = arith.constant 0 : index
    %c0_12 = arith.constant 0 : index
    %c0_13 = arith.constant 0 : index
    %12 = vector.load %arg1[%c0_11, %c0_12, %c0_13] : memref<1x16x128xf32, #tpu.memory_space<vmem>>, vector<1x16x128xf32>
    %13 = vector.shape_cast %12 : vector<1x16x128xf32> to vector<16x128xf32>
    %c1 = arith.constant 1 : index
    %c0_14 = arith.constant 0 : index
    %14 = vector.load %arg9[%c1, %c0_14] : memref<18x128xf32, #tpu.memory_space<vmem>>, vector<16x128xf32>
    tpu.vector_store %arg9[%c1, %c0_14], %13 {strides = array<i32>} : memref<18x128xf32, #tpu.memory_space<vmem>>, vector<16x128xf32>,
    %c0_15 = arith.constant 0 : index
    %c0_16 = arith.constant 0 : index
    %15 = vector.load %arg9[%c0_15, %c0_16] : memref<18x128xf32, #tpu.memory_space<vmem>>, vector<16x128xf32>
    %16 = arith.truncf %15 : vector<16x128xf32> to vector<16x128xbf16>
    %c0_17 = arith.constant 0 : index
    %c0_18 = arith.constant 0 : index
    %c0_19 = arith.constant 0 : index
    %17 = vector.load %arg2[%c0_17, %c0_18, %c0_19] : memref<3x128x128xbf16, #tpu.memory_space<vmem>>, vector<1x128x128xbf16>
    %18 = vector.shape_cast %17 : vector<1x128x128xbf16> to vector<128x128xbf16>
    %cst_20 = arith.constant dense<0.000000e+00> : vector<16x128xf32>
    %19 = tpu.matmul %16, %18, %cst_20 {dimension_numbers = #tpu.dot_dimension_numbers<[1], [0], [0], [1], [0, 0, 1, 1], [], []>} : vector<16x128xbf16>, vector<128x128xbf16>, vector<16x128xf32> -> vector<16x128xf32>
    %c1_21 = arith.constant 1 : index
    %c0_22 = arith.constant 0 : index
    %20 = vector.load %arg9[%c1_21, %c0_22] : memref<18x128xf32, #tpu.memory_space<vmem>>, vector<16x128xf32>
    %21 = arith.truncf %20 : vector<16x128xf32> to vector<16x128xbf16>
    %c1_23 = arith.constant 1 : index
    %c0_24 = arith.constant 0 : index
    %c0_25 = arith.constant 0 : index
    %22 = vector.load %arg2[%c1_23, %c0_24, %c0_25] : memref<3x128x128xbf16, #tpu.memory_space<vmem>>, vector<1x128x128xbf16>
    %23 = vector.shape_cast %22 : vector<1x128x128xbf16> to vector<128x128xbf16>
    %cst_26 = arith.constant dense<0.000000e+00> : vector<16x128xf32>
    %24 = tpu.matmul %21, %23, %cst_26 {dimension_numbers = #tpu.dot_dimension_numbers<[1], [0], [0], [1], [0, 0, 1, 1], [], []>} : vector<16x128xbf16>, vector<128x128xbf16>, vector<16x128xf32> -> vector<16x128xf32>
    %25 = arith.addf %19, %24 : vector<16x128xf32>
    %c2 = arith.constant 2 : index
    %c0_27 = arith.constant 0 : index
    %26 = vector.load %arg9[%c2, %c0_27] : memref<18x128xf32, #tpu.memory_space<vmem>>, vector<16x128xf32>
    %27 = arith.truncf %26 : vector<16x128xf32> to vector<16x128xbf16>
    %c2_28 = arith.constant 2 : index
    %c0_29 = arith.constant 0 : index
    %c0_30 = arith.constant 0 : index
    %28 = vector.load %arg2[%c2_28, %c0_29, %c0_30] : memref<3x128x128xbf16, #tpu.memory_space<vmem>>, vector<1x128x128xbf16>
    %29 = vector.shape_cast %28 : vector<1x128x128xbf16> to vector<128x128xbf16>
    %cst_31 = arith.constant dense<0.000000e+00> : vector<16x128xf32>
    %30 = tpu.matmul %27, %29, %cst_31 {dimension_numbers = #tpu.dot_dimension_numbers<[1], [0], [0], [1], [0, 0, 1, 1], [], []>} : vector<16x128xbf16>, vector<128x128xbf16>, vector<16x128xf32> -> vector<16x128xf32>
    %31 = arith.addf %25, %30 : vector<16x128xf32>
    %32 = vector.shape_cast %5 : vector<128xf32> to vector<1x128xf32>
    %33 = vector.broadcast %32 : vector<1x128xf32> to vector<16x128xf32>
    %34 = arith.mulf %31, %33 : vector<16x128xf32>
    %35 = vector.shape_cast %7 : vector<128xf32> to vector<1x128xf32>
    %36 = vector.broadcast %35 : vector<1x128xf32> to vector<16x128xf32>
    %37 = arith.addf %34, %36 : vector<16x128xf32>
    %cst_32 = arith.constant 0.000000e+00 : f32
    %38 = vector.broadcast %cst_32 : f32 to vector<16x128xf32>
    %39 = arith.maximumf %37, %38 : vector<16x128xf32>
    %c1_33 = arith.constant 1 : index
    %c0_34 = arith.constant 0 : index
    %40 = vector.load %arg9[%c1_33, %c0_34] : memref<18x128xf32, #tpu.memory_space<vmem>>, vector<16x128xf32>
    tpu.vector_store %arg9[%c1_33, %c0_34], %39 {strides = array<i32>} : memref<18x128xf32, #tpu.memory_space<vmem>>, vector<16x128xf32>,
    %c0_35 = arith.constant 0 : index
    %c0_36 = arith.constant 0 : index
    %41 = vector.load %arg9[%c0_35, %c0_36] : memref<18x128xf32, #tpu.memory_space<vmem>>, vector<16x128xf32>
    %42 = arith.truncf %41 : vector<16x128xf32> to vector<16x128xbf16>
    %c0_37 = arith.constant 0 : index
    %c0_38 = arith.constant 0 : index
    %c0_39 = arith.constant 0 : index
    %43 = vector.load %arg5[%c0_37, %c0_38, %c0_39] : memref<3x128x128xbf16, #tpu.memory_space<vmem>>, vector<1x128x128xbf16>
    %44 = vector.shape_cast %43 : vector<1x128x128xbf16> to vector<128x128xbf16>
    %cst_40 = arith.constant dense<0.000000e+00> : vector<16x128xf32>
    %45 = tpu.matmul %42, %44, %cst_40 {dimension_numbers = #tpu.dot_dimension_numbers<[1], [0], [0], [1], [0, 0, 1, 1], [], []>} : vector<16x128xbf16>, vector<128x128xbf16>, vector<16x128xf32> -> vector<16x128xf32>
    %c1_41 = arith.constant 1 : index
    %c0_42 = arith.constant 0 : index
    %46 = vector.load %arg9[%c1_41, %c0_42] : memref<18x128xf32, #tpu.memory_space<vmem>>, vector<16x128xf32>
    %47 = arith.truncf %46 : vector<16x128xf32> to vector<16x128xbf16>
    %c1_43 = arith.constant 1 : index
    %c0_44 = arith.constant 0 : index
    %c0_45 = arith.constant 0 : index
    %48 = vector.load %arg5[%c1_43, %c0_44, %c0_45] : memref<3x128x128xbf16, #tpu.memory_space<vmem>>, vector<1x128x128xbf16>
    %49 = vector.shape_cast %48 : vector<1x128x128xbf16> to vector<128x128xbf16>
    %cst_46 = arith.constant dense<0.000000e+00> : vector<16x128xf32>
    %50 = tpu.matmul %47, %49, %cst_46 {dimension_numbers = #tpu.dot_dimension_numbers<[1], [0], [0], [1], [0, 0, 1, 1], [], []>} : vector<16x128xbf16>, vector<128x128xbf16>, vector<16x128xf32> -> vector<16x128xf32>
    %51 = arith.addf %45, %50 : vector<16x128xf32>
    %c2_47 = arith.constant 2 : index
    %c0_48 = arith.constant 0 : index
    %52 = vector.load %arg9[%c2_47, %c0_48] : memref<18x128xf32, #tpu.memory_space<vmem>>, vector<16x128xf32>
    %53 = arith.truncf %52 : vector<16x128xf32> to vector<16x128xbf16>
    %c2_49 = arith.constant 2 : index
    %c0_50 = arith.constant 0 : index
    %c0_51 = arith.constant 0 : index
    %54 = vector.load %arg5[%c2_49, %c0_50, %c0_51] : memref<3x128x128xbf16, #tpu.memory_space<vmem>>, vector<1x128x128xbf16>
    %55 = vector.shape_cast %54 : vector<1x128x128xbf16> to vector<128x128xbf16>
    %cst_52 = arith.constant dense<0.000000e+00> : vector<16x128xf32>
    %56 = tpu.matmul %53, %55, %cst_52 {dimension_numbers = #tpu.dot_dimension_numbers<[1], [0], [0], [1], [0, 0, 1, 1], [], []>} : vector<16x128xbf16>, vector<128x128xbf16>, vector<16x128xf32> -> vector<16x128xf32>
    %57 = arith.addf %51, %56 : vector<16x128xf32>
    %58 = vector.shape_cast %9 : vector<128xf32> to vector<1x128xf32>
    %59 = vector.broadcast %58 : vector<1x128xf32> to vector<16x128xf32>
    %60 = arith.mulf %57, %59 : vector<16x128xf32>
    %61 = vector.shape_cast %11 : vector<128xf32> to vector<1x128xf32>
    %62 = vector.broadcast %61 : vector<1x128xf32> to vector<16x128xf32>
    %63 = arith.addf %60, %62 : vector<16x128xf32>
    %64 = arith.addf %63, %13 : vector<16x128xf32>
    %cst_53 = arith.constant 0.000000e+00 : f32
    %65 = vector.broadcast %cst_53 : f32 to vector<16x128xf32>
    %66 = arith.maximumf %64, %65 : vector<16x128xf32>
    %c0_54 = arith.constant 0 : index
    %c0_55 = arith.constant 0 : index
    %c0_56 = arith.constant 0 : index
    %67 = vector.load %arg8[%c0_54, %c0_55, %c0_56] : memref<1x16x128xf32, #tpu.memory_space<vmem>>, vector<1x16x128xf32>
    %68 = vector.shape_cast %67 : vector<1x16x128xf32> to vector<16x128xf32>
    %69 = vector.shape_cast %66 : vector<16x128xf32> to vector<1x16x128xf32>
    tpu.vector_store %arg8[%c0_54, %c0_55, %c0_56], %69 {strides = array<i32>} : memref<1x16x128xf32, #tpu.memory_space<vmem>>, vector<1x16x128xf32>,
    return
  }
  func.func @transform_0(%arg0: i32) -> (i32, i32, i32) {
    %c0_i32 = arith.constant 0 : i32
    %c0_i32_0 = arith.constant 0 : i32
    %c0_i32_1 = arith.constant 0 : i32
    return %arg0, %c0_i32, %c0_i32_0 : i32, i32, i32
  }
  func.func @transform_1(%arg0: i32) -> (i32, i32, i32) {
    %c0_i32 = arith.constant 0 : i32
    %c0_i32_0 = arith.constant 0 : i32
    %c0_i32_1 = arith.constant 0 : i32
    %c0_i32_2 = arith.constant 0 : i32
    return %c0_i32, %c0_i32_0, %c0_i32_1 : i32, i32, i32
  }
  func.func @transform_2(%arg0: i32) -> (i32, i32) {
    %c0_i32 = arith.constant 0 : i32
    %c0_i32_0 = arith.constant 0 : i32
    %c0_i32_1 = arith.constant 0 : i32
    return %c0_i32, %c0_i32_0 : i32, i32
  }
  func.func @transform_3(%arg0: i32) -> (i32, i32) {
    %c0_i32 = arith.constant 0 : i32
    %c0_i32_0 = arith.constant 0 : i32
    %c0_i32_1 = arith.constant 0 : i32
    return %c0_i32, %c0_i32_0 : i32, i32
  }
  func.func @transform_4(%arg0: i32) -> (i32, i32, i32) {
    %c0_i32 = arith.constant 0 : i32
    %c0_i32_0 = arith.constant 0 : i32
    %c0_i32_1 = arith.constant 0 : i32
    %c0_i32_2 = arith.constant 0 : i32
    return %c0_i32, %c0_i32_0, %c0_i32_1 : i32, i32, i32
  }
  func.func @transform_5(%arg0: i32) -> (i32, i32) {
    %c0_i32 = arith.constant 0 : i32
    %c0_i32_0 = arith.constant 0 : i32
    %c0_i32_1 = arith.constant 0 : i32
    return %c0_i32, %c0_i32_0 : i32, i32
  }
  func.func @transform_6(%arg0: i32) -> (i32, i32) {
    %c0_i32 = arith.constant 0 : i32
    %c0_i32_0 = arith.constant 0 : i32
    %c0_i32_1 = arith.constant 0 : i32
    return %c0_i32, %c0_i32_0 : i32, i32
  }
  func.func @transform_7(%arg0: i32) -> (i32, i32, i32) {
    %c0_i32 = arith.constant 0 : i32
    %c0_i32_0 = arith.constant 0 : i32
    %c0_i32_1 = arith.constant 0 : i32
    return %arg0, %c0_i32, %c0_i32_0 : i32, i32, i32
  }
}

</mosaic_0001>

<llo_original>
// kernel: tpu_custom_call.1
$region0: #{tpu_custom_call.1}
  #allocation0 [shape = 'u32[]', space=smem, size = 0x4, offset = 0x4, fixed_abs, tag = 'smem constant byte address 0x4 - core index']
  #allocation1 [shape = 'u32[144,128]{1,0:T(1,128)}', space=vmem, size = 0x12000, scoped, tag = 'internal scratch']
  #allocation2 [shape = 'f32[18,128]{1,0:T(8,128)}', space=vmem, size = 0x3000, scoped, tag = 'scratch operand']
  %s0 = inlined_call_operand.hbm [shape: f32[2,16,128], index: 0, kind: input, shape index: {}]
  %s1 = inlined_call_operand.hbm [shape: bf16[3,128,128], index: 1, kind: input, shape index: {}]
  %s2 = inlined_call_operand.vmem [shape: f32[1,128], index: 2, kind: input, shape index: {}]
  %s3 = inlined_call_operand.vmem [shape: f32[1,128], index: 3, kind: input, shape index: {}]
  %s4 = inlined_call_operand.hbm [shape: bf16[3,128,128], index: 4, kind: input, shape index: {}]
  %s5 = inlined_call_operand.vmem [shape: f32[1,128], index: 5, kind: input, shape index: {}]
  %s6 = inlined_call_operand.vmem [shape: f32[1,128], index: 6, kind: input, shape index: {}]
  %s7 = inlined_call_operand.hbm [shape: f32[2,16,128], index: 7, kind: output, shape index: {}]
  %s8 = sld [smem:[#allocation0]]
  $region73: #{tpu_custom_call.1} parent=0
    _
  %s10 = ssub.s32 1, %s8
  %s11 = scalar_select 0, %s10, %s8
  $region1: #{tpu_custom_call.1} parent=0
    #allocation3 [shape = 'u8[16384]{0}', space=vmem, size = 0x4000, scoped, tag = 'input window, operand 0']
    #allocation4 [shape = 's32[2]{0}', space=sflag, size = 0x8, scoped, tag = 'scoped memory for tpu_custom_call.1']
    #allocation5 [shape = 's32[2]{0}', space=sflag, size = 0x8, scoped, tag = 'scoped memory for tpu_custom_call.1']
    #allocation6 [shape = 'u8[98304]{0}', space=vmem, size = 0x18000, scoped, tag = 'input window, operand 1, single buffered']
    #allocation7 [shape = 's32[1]{0}', space=sflag, size = 0x4, scoped, tag = 'scoped memory for tpu_custom_call.1']
    #allocation8 [shape = 'u8[98304]{0}', space=vmem, size = 0x18000, scoped, tag = 'input window, operand 4, single buffered']
    #allocation9 [shape = 'u8[16384]{0}', space=vmem, size = 0x4000, scoped, tag = 'output window, operand 0']
    %12 = vsyncpa [#allocation4], 0
    %s13 = scalar_lea.sflag [#allocation4], 1
    %14 = vsyncpa %s13, 0
    %15 = vsyncpa [#allocation7], 0
    %16 = vsyncpa [#allocation5], 0
    %s17 = scalar_lea.sflag [#allocation5], 1
    %18 = vsyncpa %s17, 0
    loop: start=0, step=1, limit=4
    $region2: #{tpu_custom_call.1} parent=1 // loop_pre_header
      _
    $region3: #{tpu_custom_call.1} parent=1 // loop_header
      %s20 = sphi 0, %s24
      %p21 = scmp.ge.s32.totalorder %s20, 4
      %s30 = sphi 0, %s32
      %s33 = sphi 0, %s30
      %s34 = sphi 0, %s33
      %s50 = sphi 0, %s34
      %s54 = sphi 0, %s54
      %s56 = sphi 0, %s54
      %s57 = sphi 0, %s56
      %s71 = sphi 0, %s57
      %s75 = sphi 0, %s75
      %s77 = sphi 0, %s75
      %s78 = sphi 0, %s77
      %s92 = sphi 0, %s78
      %s96 = sphi 0, %s96
      %s98 = sphi 0, %s96
      %s99 = sphi 0, %s98
      %s113 = sphi 0, %s99
      %s117 = sphi 0, %s117
      %s119 = sphi 0, %s117
      %s120 = sphi 0, %s119
      %s134 = sphi 0, %s120
      %s138 = sphi 0, %s138
      %s140 = sphi 0, %s138
      %s141 = sphi 0, %s140
      %s155 = sphi 0, %s141
      %s159 = sphi 0, %s159
      %s161 = sphi 0, %s159
      %s162 = sphi 0, %s161
      %s176 = sphi 0, %s162
      %s182 = sphi 0, %s184
      %s185 = sphi 0, %s182
      %s186 = sphi 0, %s185
      %s202 = sphi 0, %s186
    $region4: #{tpu_custom_call.1} parent=1 // loop_header_branch
      %23 = sbr.rel (%p21) target = $region8
    $region5: #{tpu_custom_call.1} parent=1 // loop_body
      %s25 = ssub.s32 %s20, 1
      %s26 = ssub.s32 %s20, 2
      %s27 = sadd.s32 %s20, 1
      %s28 = ssub.s32 %s20, %s27
      %p29 = scmp.eq.s32.totalorder %s28, 0
      %s31 = sadd.s32 %s30, 1
      %s32 = scalar_select %p29, %s30, %s31
      %p35 = pneg %p29
      %p36 = scmp.eq.s32.totalorder %s20, 1
      %p37 = por %p35, %p36
      %p38 = scmp.ne.s32.totalorder %s30, %s33
      %p39 = scmp.eq.s32.totalorder %s20, 0
      %p40 = por %p38, %p39
      %p41 = scmp.ne.s32.totalorder %s30, %s33
      %p42 = scmp.eq.s32.totalorder %s25, 1
      %p43 = por %p41, %p42
      %p44 = scmp.ne.s32.totalorder %s33, %s34
      %p45 = scmp.eq.s32.totalorder %s25, 0
      %p46 = por %p44, %p45
      %p47 = scmp.ne.s32.totalorder %s33, %s34
      %p48 = scmp.eq.s32.totalorder %s26, 1
      %p49 = por %p47, %p48
      %p51 = scmp.ne.s32.totalorder %s34, %s50
      %p52 = scmp.eq.s32.totalorder %s26, 0
      %p53 = por %p51, %p52
      %s55 = sadd.s32 %s54, 1
      %p58 = scmp.eq.s32.totalorder %s20, 1
      %p59 = scmp.ne.s32.totalorder %s54, %s56
      %p60 = scmp.eq.s32.totalorder %s20, 0
      %p61 = por %p59, %p60
      %p62 = scmp.ne.s32.totalorder %s54, %s56
      %p63 = scmp.eq.s32.totalorder %s25, 1
      %p64 = por %p62, %p63
      %p65 = scmp.ne.s32.totalorder %s56, %s57
      %p66 = scmp.eq.s32.totalorder %s25, 0
      %p67 = por %p65, %p66
      %p68 = scmp.ne.s32.totalorder %s56, %s57
      %p69 = scmp.eq.s32.totalorder %s26, 1
      %p70 = por %p68, %p69
      %p72 = scmp.ne.s32.totalorder %s57, %s71
      %p73 = scmp.eq.s32.totalorder %s26, 0
      %p74 = por %p72, %p73
      %s76 = sadd.s32 %s75, 1
      %p79 = scmp.eq.s32.totalorder %s20, 1
      %p80 = scmp.ne.s32.totalorder %s75, %s77
      %p81 = scmp.eq.s32.totalorder %s20, 0
      %p82 = por %p80, %p81
      %p83 = scmp.ne.s32.totalorder %s75, %s77
      %p84 = scmp.eq.s32.totalorder %s25, 1
      %p85 = por %p83, %p84
      %p86 = scmp.ne.s32.totalorder %s77, %s78
      %p87 = scmp.eq.s32.totalorder %s25, 0
      %p88 = por %p86, %p87
      %p89 = scmp.ne.s32.totalorder %s77, %s78
      %p90 = scmp.eq.s32.totalorder %s26, 1
      %p91 = por %p89, %p90
      %p93 = scmp.ne.s32.totalorder %s78, %s92
      %p94 = scmp.eq.s32.totalorder %s26, 0
      %p95 = por %p93, %p94
      %s97 = sadd.s32 %s96, 1
      %p100 = scmp.eq.s32.totalorder %s20, 1
      %p101 = scmp.ne.s32.totalorder %s96, %s98
      %p102 = scmp.eq.s32.totalorder %s20, 0
      %p103 = por %p101, %p102
      %p104 = scmp.ne.s32.totalorder %s96, %s98
      %p105 = scmp.eq.s32.totalorder %s25, 1
      %p106 = por %p104, %p105
      %p107 = scmp.ne.s32.totalorder %s98, %s99
      %p108 = scmp.eq.s32.totalorder %s25, 0
      %p109 = por %p107, %p108
      %p110 = scmp.ne.s32.totalorder %s98, %s99
      %p111 = scmp.eq.s32.totalorder %s26, 1
      %p112 = por %p110, %p111
      %p114 = scmp.ne.s32.totalorder %s99, %s113
      %p115 = scmp.eq.s32.totalorder %s26, 0
      %p116 = por %p114, %p115
      %s118 = sadd.s32 %s117, 1
      %p121 = scmp.eq.s32.totalorder %s20, 1
      %p122 = scmp.ne.s32.totalorder %s117, %s119
      %p123 = scmp.eq.s32.totalorder %s20, 0
      %p124 = por %p122, %p123
      %p125 = scmp.ne.s32.totalorder %s117, %s119
      %p126 = scmp.eq.s32.totalorder %s25, 1
      %p127 = por %p125, %p126
      %p128 = scmp.ne.s32.totalorder %s119, %s120
      %p129 = scmp.eq.s32.totalorder %s25, 0
      %p130 = por %p128, %p129
      %p131 = scmp.ne.s32.totalorder %s119, %s120
      %p132 = scmp.eq.s32.totalorder %s26, 1
      %p133 = por %p131, %p132
      %p135 = scmp.ne.s32.totalorder %s120, %s134
      %p136 = scmp.eq.s32.totalorder %s26, 0
      %p137 = por %p135, %p136
      %s139 = sadd.s32 %s138, 1
      %p142 = scmp.eq.s32.totalorder %s20, 1
      %p143 = scmp.ne.s32.totalorder %s138, %s140
      %p144 = scmp.eq.s32.totalorder %s20, 0
      %p145 = por %p143, %p144
      %p146 = scmp.ne.s32.totalorder %s138, %s140
      %p147 = scmp.eq.s32.totalorder %s25, 1
      %p148 = por %p146, %p147
      %p149 = scmp.ne.s32.totalorder %s140, %s141
      %p150 = scmp.eq.s32.totalorder %s25, 0
      %p151 = por %p149, %p150
      %p152 = scmp.ne.s32.totalorder %s140, %s141
      %p153 = scmp.eq.s32.totalorder %s26, 1
      %p154 = por %p152, %p153
      %p156 = scmp.ne.s32.totalorder %s141, %s155
      %p157 = scmp.eq.s32.totalorder %s26, 0
      %p158 = por %p156, %p157
      %s160 = sadd.s32 %s159, 1
      %p163 = scmp.eq.s32.totalorder %s20, 1
      %p164 = scmp.ne.s32.totalorder %s159, %s161
      %p165 = scmp.eq.s32.totalorder %s20, 0
      %p166 = por %p164, %p165
      %p167 = scmp.ne.s32.totalorder %s159, %s161
      %p168 = scmp.eq.s32.totalorder %s25, 1
      %p169 = por %p167, %p168
      %p170 = scmp.ne.s32.totalorder %s161, %s162
      %p171 = scmp.eq.s32.totalorder %s25, 0
      %p172 = por %p170, %p171
      %p173 = scmp.ne.s32.totalorder %s161, %s162
      %p174 = scmp.eq.s32.totalorder %s26, 1
      %p175 = por %p173, %p174
      %p177 = scmp.ne.s32.totalorder %s162, %s176
      %p178 = scmp.eq.s32.totalorder %s26, 0
      %p179 = por %p177, %p178
      %s180 = ssub.s32 %s20, %s27
      %p181 = scmp.eq.s32.totalorder %s180, 0
      %s183 = sadd.s32 %s182, 1
      %s184 = scalar_select %p181, %s182, %s183
      %p187 = pneg %p181
      %p188 = scmp.eq.s32.totalorder %s20, 1
      %p189 = por %p187, %p188
      %p190 = scmp.ne.s32.totalorder %s182, %s185
      %p191 = scmp.eq.s32.totalorder %s20, 0
      %p192 = por %p190, %p191
      %p193 = scmp.ne.s32.totalorder %s182, %s185
      %p194 = scmp.eq.s32.totalorder %s25, 1
      %p195 = por %p193, %p194
      %p196 = scmp.ne.s32.totalorder %s185, %s186
      %p197 = scmp.eq.s32.totalorder %s25, 0
      %p198 = por %p196, %p197
      %p199 = scmp.ne.s32.totalorder %s185, %s186
      %p200 = scmp.eq.s32.totalorder %s26, 1
      %p201 = por %p199, %p200
      %p203 = scmp.ne.s32.totalorder %s186, %s202
      %p204 = scmp.eq.s32.totalorder %s26, 0
      %p205 = por %p203, %p204
      %p206 = scmp.le.s32.totalorder 1, %s20
      %p207 = scmp.lt.s32.totalorder %s20, 3
      %p208 = pnand %p206, %p207
      %p209 = pneg %p208
      // Predicated region
      $region9: #{tpu_custom_call.1} parent=5 // pred_check
        _
      $region10: #{tpu_custom_call.1} parent=5 // pred_check_branch
        %211 = sbr.rel (%p208) target = $region12
      $region11: #{tpu_custom_call.1} parent=5 // pred_region
        %s212 = ssub.s32 %s20, 1
        // Predicated region
        $region13: #{tpu_custom_call.1} parent=11 // pred_check
          %p213 = pneg %p67
        $region14: #{tpu_custom_call.1} parent=11 // pred_check_branch
          %215 = sbr.rel (%p213) target = $region16
        $region15: #{tpu_custom_call.1} parent=11 // pred_region
          %s217 = ssub.s32 3072, 3072
          %218 = vsyncadd [#allocation7], %s217
          %s219 = sshll.u32 [#allocation6], 4
          %s220 = int_to_ptr.vmem [resolvable:$true] %s219
          %225 = dma.hbm_to_vmem [thread:$0]  %s1, 3072, %s220, [#allocation7], 64, 64, 4
        $region16: #{tpu_custom_call.1} parent=11 // pred_fallthru
          _
        // Predicated region
        $region17: #{tpu_custom_call.1} parent=11 // pred_check
          %p226 = pneg %p88
        $region18: #{tpu_custom_call.1} parent=11 // pred_check_branch
          %228 = sbr.rel (%p226) target = $region20
        $region19: #{tpu_custom_call.1} parent=11 // pred_region
          _
        $region20: #{tpu_custom_call.1} parent=11 // pred_fallthru
          _
        // Predicated region
        $region21: #{tpu_custom_call.1} parent=11 // pred_check
          %p229 = pneg %p109
        $region22: #{tpu_custom_call.1} parent=11 // pred_check_branch
          %231 = sbr.rel (%p229) target = $region24
        $region23: #{tpu_custom_call.1} parent=11 // pred_region
          _
        $region24: #{tpu_custom_call.1} parent=11 // pred_fallthru
          _
        // Predicated region
        $region25: #{tpu_custom_call.1} parent=11 // pred_check
          %p232 = pneg %p130
        $region26: #{tpu_custom_call.1} parent=11 // pred_check_branch
          %234 = sbr.rel (%p232) target = $region28
        $region27: #{tpu_custom_call.1} parent=11 // pred_region
          %s236 = ssub.s32 3072, 3072
          %237 = vsyncadd [#allocation7], %s236
          %s238 = sshll.u32 [#allocation8], 4
          %s239 = int_to_ptr.vmem [resolvable:$true] %s238
          %244 = dma.hbm_to_vmem [thread:$0]  %s4, 3072, %s239, [#allocation7], 64, 64, 4
        $region28: #{tpu_custom_call.1} parent=11 // pred_fallthru
          _
        // Predicated region
        $region29: #{tpu_custom_call.1} parent=11 // pred_check
          %p245 = pneg %p151
        $region30: #{tpu_custom_call.1} parent=11 // pred_check_branch
          %247 = sbr.rel (%p245) target = $region32
        $region31: #{tpu_custom_call.1} parent=11 // pred_region
          _
        $region32: #{tpu_custom_call.1} parent=11 // pred_fallthru
          _
        // Predicated region
        $region33: #{tpu_custom_call.1} parent=11 // pred_check
          %p248 = pneg %p172
        $region34: #{tpu_custom_call.1} parent=11 // pred_check_branch
          %250 = sbr.rel (%p248) target = $region36
        $region35: #{tpu_custom_call.1} parent=11 // pred_region
          _
        $region36: #{tpu_custom_call.1} parent=11 // pred_fallthru
          _
      $region12: #{tpu_custom_call.1} parent=5 // pred_fallthru
        _
      %p251 = scmp.lt.s32.totalorder %s20, 2
      // Predicated region
      $region37: #{tpu_custom_call.1} parent=5 // pred_check
        %p252 = pneg %p251
      $region38: #{tpu_custom_call.1} parent=5 // pred_check_branch
        %254 = sbr.rel (%p252) target = $region40
      $region39: #{tpu_custom_call.1} parent=5 // pred_region
        // Predicated region
        $region41: #{tpu_custom_call.1} parent=39 // pred_check
          %p255 = pneg %p40
        $region42: #{tpu_custom_call.1} parent=39 // pred_check_branch
          %257 = sbr.rel (%p255) target = $region44
        $region43: #{tpu_custom_call.1} parent=39 // pred_region
          %s258 = sand.u32 %s30, 1
          %s259 = scalar_lea.sflag [#allocation4], %s258
          %s260 = sand.u32 %s30, 1
          %s261 = smul.addr %s260, 16
          %s262 = scalar_lea.vmem [#allocation3], %s261
          %s264 = ssub.s32 256, 256
          %265 = vsyncadd %s259, %s264
          %s266 = smul.addr %s20, 2
          %s267 = smul.addr %s266, 128
          %s268 = scalar_lea.hbm %s0, %s267
          %s269 = sshll.u32 %s262, 4
          %s270 = int_to_ptr.vmem [resolvable:$true] %s269
          %275 = dma.hbm_to_vmem [thread:$0]  %s268, 256, %s270, %s259, 128, 128, 8
        $region44: #{tpu_custom_call.1} parent=39 // pred_fallthru
          _
      $region40: #{tpu_custom_call.1} parent=5 // pred_fallthru
        _
      %p276 = scmp.le.s32.totalorder 1, %s20
      %p277 = scmp.lt.s32.totalorder %s20, 3
      %p278 = pnand %p276, %p277
      %p279 = pneg %p278
      // Predicated region
      $region45: #{tpu_custom_call.1} parent=5 // pred_check
        _
      $region46: #{tpu_custom_call.1} parent=5 // pred_check_branch
        %281 = sbr.rel (%p278) target = $region48
      $region47: #{tpu_custom_call.1} parent=5 // pred_region
        %s282 = ssub.s32 %s20, 1
        %s283 = sand.u32 %s33, 1
        %s284 = scalar_lea.sflag [#allocation4], %s283
        %s285 = sand.u32 %s33, 1
        %s286 = smul.addr %s285, 16
        %s287 = scalar_lea.vmem [#allocation3], %s286
        // Predicated region
        $region49: #{tpu_custom_call.1} parent=47 // pred_check
          %p288 = pneg %p46
        $region50: #{tpu_custom_call.1} parent=47 // pred_check_branch
          %290 = sbr.rel (%p288) target = $region52
        $region51: #{tpu_custom_call.1} parent=47 // pred_region
          %291 = dma.done %s284, 256
        $region52: #{tpu_custom_call.1} parent=47 // pred_fallthru
          _
        // Predicated region
        $region53: #{tpu_custom_call.1} parent=47 // pred_check
          %p292 = pneg %p67
        $region54: #{tpu_custom_call.1} parent=47 // pred_check_branch
          %294 = sbr.rel (%p292) target = $region56
        $region55: #{tpu_custom_call.1} parent=47 // pred_region
          %295 = dma.done [#allocation7], 3072
        $region56: #{tpu_custom_call.1} parent=47 // pred_fallthru
          _
        // Predicated region
        $region57: #{tpu_custom_call.1} parent=47 // pred_check
          %p296 = pneg %p130
        $region58: #{tpu_custom_call.1} parent=47 // pred_check_branch
          %298 = sbr.rel (%p296) target = $region60
        $region59: #{tpu_custom_call.1} parent=47 // pred_region
          %299 = dma.done [#allocation7], 3072
        $region60: #{tpu_custom_call.1} parent=47 // pred_fallthru
          _
        %s300 = sand.u32 %s33, 1
        %s301 = scalar_lea.sflag [#allocation4], %s300
        %s302 = sand.u32 %s33, 1
        %s303 = smul.addr %s302, 16
        %s304 = scalar_lea.vmem [#allocation3], %s303
        %p305 = pneg %p46
        %p306 = pneg %p43
        %p307 = pneg %p67
        %p308 = pneg %p64
        %p309 = pneg %p88
        %p310 = pneg %p85
        %p311 = pneg %p109
        %p312 = pneg %p106
        %p313 = pneg %p130
        %p314 = pneg %p127
        %p315 = pneg %p151
        %p316 = pneg %p148
        %p317 = pneg %p172
        %p318 = pneg %p169
        %p319 = pneg %p198
        %p320 = pneg %p195
        %s321 = sand.u32 %s185, 1
        %s322 = scalar_lea.sflag [#allocation5], %s321
        %s323 = sand.u32 %s185, 1
        %s324 = smul.addr %s323, 16
        %s325 = scalar_lea.vmem [#allocation9], %s324
        %327 = vst [vmem:[#allocation2] sm:$0x1] 0.0
        %328 = vst [vmem:[#allocation2 + $0x11] sm:$0x1] 0.0
        %v329 = vld [vmem:[%s2] sm:$0x1]
        %v330 = vld [vmem:[%s3] sm:$0x1]
        %v331 = vld [vmem:[%s5] sm:$0x1]
        %v332 = vld [vmem:[%s6] sm:$0x1]
        %v333 = vld [vmem:[%s287] sm:$0xff]
        %v334 = vld [vmem:[%s287 + $0x8] sm:$0xff]
        %335 = vst [vmem:[#allocation2 + $0x1] sm:$0xff] %v333
        %336 = vst [vmem:[#allocation2 + $0x9] sm:$0xff] %v334
        %v337 = vld [vmem:[#allocation2] sm:$0xff]
        %v338 = vld [vmem:[#allocation2 + $0x8] sm:$0xff]
        %v339 = vpack.c.bf16 %v338, %v337
        %v340 = vld [vmem:[#allocation6] sm:$0xf]
        %v341 = vld [vmem:[#allocation6 + $0x4] sm:$0xf]
        %v342 = vld [vmem:[#allocation6 + $0x8] sm:$0xf]
        %v343 = vld [vmem:[#allocation6 + $0xc] sm:$0xf]
        %v344 = vld [vmem:[#allocation6 + $0x10] sm:$0xf]
        %v345 = vld [vmem:[#allocation6 + $0x14] sm:$0xf]
        %v346 = vld [vmem:[#allocation6 + $0x18] sm:$0xf]
        %v347 = vld [vmem:[#allocation6 + $0x1c] sm:$0xf]
        %v348 = vld [vmem:[#allocation6 + $0x20] sm:$0xf]
        %v349 = vld [vmem:[#allocation6 + $0x24] sm:$0xf]
        %v350 = vld [vmem:[#allocation6 + $0x28] sm:$0xf]
        %v351 = vld [vmem:[#allocation6 + $0x2c] sm:$0xf]
        %v352 = vld [vmem:[#allocation6 + $0x30] sm:$0xf]
        %v353 = vld [vmem:[#allocation6 + $0x34] sm:$0xf]
        %v354 = vld [vmem:[#allocation6 + $0x38] sm:$0xf]
        %v355 = vld [vmem:[#allocation6 + $0x3c] sm:$0xf]
        %v356 = vld [vmem:[#allocation2 + $0x1] sm:$0xff]
        %v357 = vld [vmem:[#allocation2 + $0x9] sm:$0xff]
        %v358 = vpack.c.bf16 %v357, %v356
        %s359 = scalar_lea.vmem [#allocation6], 64
        %v360 = vld [vmem:[%s359] sm:$0xf]
        %v361 = vld [vmem:[%s359 + $0x4] sm:$0xf]
        %v362 = vld [vmem:[%s359 + $0x8] sm:$0xf]
        %v363 = vld [vmem:[%s359 + $0xc] sm:$0xf]
        %v364 = vld [vmem:[%s359 + $0x10] sm:$0xf]
        %v365 = vld [vmem:[%s359 + $0x14] sm:$0xf]
        %v366 = vld [vmem:[%s359 + $0x18] sm:$0xf]
        %v367 = vld [vmem:[%s359 + $0x1c] sm:$0xf]
        %v368 = vld [vmem:[%s359 + $0x20] sm:$0xf]
        %v369 = vld [vmem:[%s359 + $0x24] sm:$0xf]
        %v370 = vld [vmem:[%s359 + $0x28] sm:$0xf]
        %v371 = vld [vmem:[%s359 + $0x2c] sm:$0xf]
        %v372 = vld [vmem:[%s359 + $0x30] sm:$0xf]
        %v373 = vld [vmem:[%s359 + $0x34] sm:$0xf]
        %v374 = vld [vmem:[%s359 + $0x38] sm:$0xf]
        %v375 = vld [vmem:[%s359 + $0x3c] sm:$0xf]
        %v392 = vunpack.c.l.b16 %v360
        %v393 = vunpack.c.l.b16 %v361
        %v394 = vunpack.c.l.b16 %v362
        %v395 = vunpack.c.l.b16 %v363
        %v396 = vunpack.c.l.b16 %v364
        %v397 = vunpack.c.l.b16 %v365
        %v398 = vunpack.c.l.b16 %v366
        %v399 = vunpack.c.l.b16 %v367
        %v400 = vunpack.c.l.b16 %v368
        %v401 = vunpack.c.l.b16 %v369
        %v402 = vunpack.c.l.b16 %v370
        %v403 = vunpack.c.l.b16 %v371
        %v404 = vunpack.c.l.b16 %v372
        %v405 = vunpack.c.l.b16 %v373
        %v406 = vunpack.c.l.b16 %v374
        %v407 = vunpack.c.l.b16 %v375
        %v408 = vpack.c.b16 %v393, %v392
        %v409 = vpack.c.b16 %v395, %v394
        %v410 = vpack.c.b16 %v397, %v396
        %v411 = vpack.c.b16 %v399, %v398
        %v412 = vpack.c.b16 %v401, %v400
        %v413 = vpack.c.b16 %v403, %v402
        %v414 = vpack.c.b16 %v405, %v404
        %v415 = vpack.c.b16 %v407, %v406
        %424 = vmatprep.subr.bf16.mxu0 0
        %425 = vmatpush1.bf16.msra.mxu0 %v415
        %426 = vmatprep.subr.bf16.mxu0 0
        %427 = vmatpush1.bf16.msra.mxu0 %v414
        %428 = vmatprep.subr.bf16.mxu0 0
        %429 = vmatpush1.bf16.msra.mxu0 %v413
        %430 = vmatprep.subr.bf16.mxu0 0
        %431 = vmatpush1.bf16.msra.mxu0 %v412
        %432 = vmatprep.subr.bf16.mxu0 0
        %433 = vmatpush1.bf16.msra.mxu0 %v411
        %434 = vmatprep.subr.bf16.mxu0 0
        %435 = vmatpush1.bf16.msra.mxu0 %v410
        %436 = vmatprep.subr.bf16.mxu0 0
        %437 = vmatpush1.bf16.msra.mxu0 %v409
        %438 = vmatprep.subr.bf16.mxu0 0
        %439 = vmatpush1.bf16.msra.mxu0 %v408
        %440 = vmatprep.subr.bf16.mxu0 0
        %441 = vmatpush2.bf16.msra.mxu0 0
        %442 = vmatprep.subr.bf16.mxu0 0
        %443 = vmatpush2.bf16.msra.mxu0 0
        %444 = vmatprep.subr.bf16.mxu0 0
        %445 = vmatpush2.bf16.msra.mxu0 0
        %446 = vmatprep.subr.bf16.mxu0 0
        %447 = vmatpush2.bf16.msra.mxu0 0
        %448 = vmatprep.subr.bf16.mxu0 0
        %449 = vmatpush2.bf16.msra.mxu0 0
        %450 = vmatprep.subr.bf16.mxu0 0
        %451 = vmatpush2.bf16.msra.mxu0 0
        %452 = vmatprep.subr.bf16.mxu0 0
        %453 = vmatpush2.bf16.msra.mxu0 0
        %454 = vmatprep.subr.bf16.mxu0 0
        %455 = vmatpush2.bf16.msra.mxu0 0
        %456 = vmatprep.mubr.bf16.mxu0 0
        %457 = vmatmul.mubr.bf16.gmra.mxu0 %v358
        %v458 = vpop.f32.mrf.mxu0
        %v459 = vadd.f32 0.0, %v458
        %v460 = vpop.f32.mrf.mxu0
        %v461 = vpop.f32.mrf.mxu0
        %v462 = vadd.f32 0.0, %v461
        %v463 = vpop.f32.mrf.mxu0
        %464 = vdwg.mxu0
        %v481 = vunpack.c.l.b16 %v340
        %v482 = vunpack.c.l.b16 %v341
        %v483 = vunpack.c.l.b16 %v342
        %v484 = vunpack.c.l.b16 %v343
        %v485 = vunpack.c.l.b16 %v344
        %v486 = vunpack.c.l.b16 %v345
        %v487 = vunpack.c.l.b16 %v346
        %v488 = vunpack.c.l.b16 %v347
        %v489 = vunpack.c.l.b16 %v348
        %v490 = vunpack.c.l.b16 %v349
        %v491 = vunpack.c.l.b16 %v350
        %v492 = vunpack.c.l.b16 %v351
        %v493 = vunpack.c.l.b16 %v352
        %v494 = vunpack.c.l.b16 %v353
        %v495 = vunpack.c.l.b16 %v354
        %v496 = vunpack.c.l.b16 %v355
        %v497 = vpack.c.b16 %v482, %v481
        %v498 = vpack.c.b16 %v484, %v483
        %v499 = vpack.c.b16 %v486, %v485
        %v500 = vpack.c.b16 %v488, %v487
        %v501 = vpack.c.b16 %v490, %v489
        %v502 = vpack.c.b16 %v492, %v491
        %v503 = vpack.c.b16 %v494, %v493
        %v504 = vpack.c.b16 %v496, %v495
        %513 = vmatprep.subr.bf16.mxu0 0
        %514 = vmatpush1.bf16.msra.mxu0 %v504
        %515 = vmatprep.subr.bf16.mxu0 0
        %516 = vmatpush1.bf16.msra.mxu0 %v503
        %517 = vmatprep.subr.bf16.mxu0 0
        %518 = vmatpush1.bf16.msra.mxu0 %v502
        %519 = vmatprep.subr.bf16.mxu0 0
        %520 = vmatpush1.bf16.msra.mxu0 %v501
        %521 = vmatprep.subr.bf16.mxu0 0
        %522 = vmatpush1.bf16.msra.mxu0 %v500
        %523 = vmatprep.subr.bf16.mxu0 0
        %524 = vmatpush1.bf16.msra.mxu0 %v499
        %525 = vmatprep.subr.bf16.mxu0 0
        %526 = vmatpush1.bf16.msra.mxu0 %v498
        %527 = vmatprep.subr.bf16.mxu0 0
        %528 = vmatpush1.bf16.msra.mxu0 %v497
        %529 = vmatprep.subr.bf16.mxu0 0
        %530 = vmatpush2.bf16.msra.mxu0 0
        %531 = vmatprep.subr.bf16.mxu0 0
        %532 = vmatpush2.bf16.msra.mxu0 0
        %533 = vmatprep.subr.bf16.mxu0 0
        %534 = vmatpush2.bf16.msra.mxu0 0
        %535 = vmatprep.subr.bf16.mxu0 0
        %536 = vmatpush2.bf16.msra.mxu0 0
        %537 = vmatprep.subr.bf16.mxu0 0
        %538 = vmatpush2.bf16.msra.mxu0 0
        %539 = vmatprep.subr.bf16.mxu0 0
        %540 = vmatpush2.bf16.msra.mxu0 0
        %541 = vmatprep.subr.bf16.mxu0 0
        %542 = vmatpush2.bf16.msra.mxu0 0
        %543 = vmatprep.subr.bf16.mxu0 0
        %544 = vmatpush2.bf16.msra.mxu0 0
        %545 = vmatprep.mubr.bf16.mxu0 0
        %546 = vmatmul.mubr.bf16.gmra.mxu0 %v339
        %v547 = vpop.f32.mrf.mxu0
        %v548 = vadd.f32 %v459, %v547
        %v549 = vpop.f32.mrf.mxu0
        %v550 = vpop.f32.mrf.mxu0
        %v551 = vadd.f32 %v462, %v550
        %v552 = vpop.f32.mrf.mxu0
        %553 = vdwg.mxu0
        %v554 = vld [vmem:[#allocation2 + $0x2] sm:$0xff]
        %v555 = vld [vmem:[#allocation2 + $0xa] sm:$0xff]
        %v556 = vpack.c.bf16 %v555, %v554
        %s557 = scalar_lea.vmem [#allocation6], 128
        %v558 = vld [vmem:[%s557] sm:$0xf]
        %v559 = vld [vmem:[%s557 + $0x4] sm:$0xf]
        %v560 = vld [vmem:[%s557 + $0x8] sm:$0xf]
        %v561 = vld [vmem:[%s557 + $0xc] sm:$0xf]
        %v562 = vld [vmem:[%s557 + $0x10] sm:$0xf]
        %v563 = vld [vmem:[%s557 + $0x14] sm:$0xf]
        %v564 = vld [vmem:[%s557 + $0x18] sm:$0xf]
        %v565 = vld [vmem:[%s557 + $0x1c] sm:$0xf]
        %v566 = vld [vmem:[%s557 + $0x20] sm:$0xf]
        %v567 = vld [vmem:[%s557 + $0x24] sm:$0xf]
        %v568 = vld [vmem:[%s557 + $0x28] sm:$0xf]
        %v569 = vld [vmem:[%s557 + $0x2c] sm:$0xf]
        %v570 = vld [vmem:[%s557 + $0x30] sm:$0xf]
        %v571 = vld [vmem:[%s557 + $0x34] sm:$0xf]
        %v572 = vld [vmem:[%s557 + $0x38] sm:$0xf]
        %v573 = vld [vmem:[%s557 + $0x3c] sm:$0xf]
        %v590 = vunpack.c.l.b16 %v558
        %v591 = vunpack.c.l.b16 %v559
        %v592 = vunpack.c.l.b16 %v560
        %v593 = vunpack.c.l.b16 %v561
        %v594 = vunpack.c.l.b16 %v562
        %v595 = vunpack.c.l.b16 %v563
        %v596 = vunpack.c.l.b16 %v564
        %v597 = vunpack.c.l.b16 %v565
        %v598 = vunpack.c.l.b16 %v566
        %v599 = vunpack.c.l.b16 %v567
        %v600 = vunpack.c.l.b16 %v568
        %v601 = vunpack.c.l.b16 %v569
        %v602 = vunpack.c.l.b16 %v570
        %v603 = vunpack.c.l.b16 %v571
        %v604 = vunpack.c.l.b16 %v572
        %v605 = vunpack.c.l.b16 %v573
        %v606 = vpack.c.b16 %v591, %v590
        %v607 = vpack.c.b16 %v593, %v592
        %v608 = vpack.c.b16 %v595, %v594
        %v609 = vpack.c.b16 %v597, %v596
        %v610 = vpack.c.b16 %v599, %v598
        %v611 = vpack.c.b16 %v601, %v600
        %v612 = vpack.c.b16 %v603, %v602
        %v613 = vpack.c.b16 %v605, %v604
        %622 = vmatprep.subr.bf16.mxu0 0
        %623 = vmatpush1.bf16.msra.mxu0 %v613
        %624 = vmatprep.subr.bf16.mxu0 0
        %625 = vmatpush1.bf16.msra.mxu0 %v612
        %626 = vmatprep.subr.bf16.mxu0 0
        %627 = vmatpush1.bf16.msra.mxu0 %v611
        %628 = vmatprep.subr.bf16.mxu0 0
        %629 = vmatpush1.bf16.msra.mxu0 %v610
        %630 = vmatprep.subr.bf16.mxu0 0
        %631 = vmatpush1.bf16.msra.mxu0 %v609
        %632 = vmatprep.subr.bf16.mxu0 0
        %633 = vmatpush1.bf16.msra.mxu0 %v608
        %634 = vmatprep.subr.bf16.mxu0 0
        %635 = vmatpush1.bf16.msra.mxu0 %v607
        %636 = vmatprep.subr.bf16.mxu0 0
        %637 = vmatpush1.bf16.msra.mxu0 %v606
        %638 = vmatprep.subr.bf16.mxu0 0
        %639 = vmatpush2.bf16.msra.mxu0 0
        %640 = vmatprep.subr.bf16.mxu0 0
        %641 = vmatpush2.bf16.msra.mxu0 0
        %642 = vmatprep.subr.bf16.mxu0 0
        %643 = vmatpush2.bf16.msra.mxu0 0
        %644 = vmatprep.subr.bf16.mxu0 0
        %645 = vmatpush2.bf16.msra.mxu0 0
        %646 = vmatprep.subr.bf16.mxu0 0
        %647 = vmatpush2.bf16.msra.mxu0 0
        %648 = vmatprep.subr.bf16.mxu0 0
        %649 = vmatpush2.bf16.msra.mxu0 0
        %650 = vmatprep.subr.bf16.mxu0 0
        %651 = vmatpush2.bf16.msra.mxu0 0
        %652 = vmatprep.subr.bf16.mxu0 0
        %653 = vmatpush2.bf16.msra.mxu0 0
        %654 = vmatprep.mubr.bf16.mxu0 0
        %655 = vmatmul.mubr.bf16.gmra.mxu0 %v556
        %v656 = vpop.f32.mrf.mxu0
        %v657 = vadd.f32 0.0, %v656
        %v658 = vpop.f32.mrf.mxu0
        %v659 = vpop.f32.mrf.mxu0
        %v660 = vadd.f32 0.0, %v659
        %v661 = vpop.f32.mrf.mxu0
        %662 = vdwg.mxu0
        %v663 = vadd.f32 %v548, %v657
        %v664 = vadd.f32 %v551, %v660
        %v666 = vlaneseq
        %v667 = vshrl.u32 %v666, 7
        %v668 = vsub.s32 0, %v667
        %v669 = vrot.slane %v329, %v668
        %v671 = vmul.f32 %v663, %v669
        %v672 = vmul.f32 %v664, %v669
        %v674 = vlaneseq
        %v675 = vshrl.u32 %v674, 7
        %v676 = vsub.s32 0, %v675
        %v677 = vrot.slane %v330, %v676
        %v679 = vadd.f32 %v671, %v677
        %v680 = vadd.f32 %v672, %v677
        %v681 = vmax.f32 %v679, 0.0
        %v682 = vmax.f32 %v680, 0.0
        %683 = vst [vmem:[#allocation2 + $0x1] sm:$0xff] %v681
        %684 = vst [vmem:[#allocation2 + $0x9] sm:$0xff] %v682
        %v685 = vld [vmem:[#allocation2] sm:$0xff]
        %v686 = vld [vmem:[#allocation2 + $0x8] sm:$0xff]
        %v687 = vpack.c.bf16 %v686, %v685
        %v688 = vld [vmem:[#allocation8] sm:$0xf]
        %v689 = vld [vmem:[#allocation8 + $0x4] sm:$0xf]
        %v690 = vld [vmem:[#allocation8 + $0x8] sm:$0xf]
        %v691 = vld [vmem:[#allocation8 + $0xc] sm:$0xf]
        %v692 = vld [vmem:[#allocation8 + $0x10] sm:$0xf]
        %v693 = vld [vmem:[#allocation8 + $0x14] sm:$0xf]
        %v694 = vld [vmem:[#allocation8 + $0x18] sm:$0xf]
        %v695 = vld [vmem:[#allocation8 + $0x1c] sm:$0xf]
        %v696 = vld [vmem:[#allocation8 + $0x20] sm:$0xf]
        %v697 = vld [vmem:[#allocation8 + $0x24] sm:$0xf]
        %v698 = vld [vmem:[#allocation8 + $0x28] sm:$0xf]
        %v699 = vld [vmem:[#allocation8 + $0x2c] sm:$0xf]
        %v700 = vld [vmem:[#allocation8 + $0x30] sm:$0xf]
        %v701 = vld [vmem:[#allocation8 + $0x34] sm:$0xf]
        %v702 = vld [vmem:[#allocation8 + $0x38] sm:$0xf]
        %v703 = vld [vmem:[#allocation8 + $0x3c] sm:$0xf]
        %v704 = vld [vmem:[#allocation2 + $0x1] sm:$0xff]
        %v705 = vld [vmem:[#allocation2 + $0x9] sm:$0xff]
        %v706 = vpack.c.bf16 %v705, %v704
        %s707 = scalar_lea.vmem [#allocation8], 64
        %v708 = vld [vmem:[%s707] sm:$0xf]
        %v709 = vld [vmem:[%s707 + $0x4] sm:$0xf]
        %v710 = vld [vmem:[%s707 + $0x8] sm:$0xf]
        %v711 = vld [vmem:[%s707 + $0xc] sm:$0xf]
        %v712 = vld [vmem:[%s707 + $0x10] sm:$0xf]
        %v713 = vld [vmem:[%s707 + $0x14] sm:$0xf]
        %v714 = vld [vmem:[%s707 + $0x18] sm:$0xf]
        %v715 = vld [vmem:[%s707 + $0x1c] sm:$0xf]
        %v716 = vld [vmem:[%s707 + $0x20] sm:$0xf]
        %v717 = vld [vmem:[%s707 + $0x24] sm:$0xf]
        %v718 = vld [vmem:[%s707 + $0x28] sm:$0xf]
        %v719 = vld [vmem:[%s707 + $0x2c] sm:$0xf]
        %v720 = vld [vmem:[%s707 + $0x30] sm:$0xf]
        %v721 = vld [vmem:[%s707 + $0x34] sm:$0xf]
        %v722 = vld [vmem:[%s707 + $0x38] sm:$0xf]
        %v723 = vld [vmem:[%s707 + $0x3c] sm:$0xf]
        %v740 = vunpack.c.l.b16 %v708
        %v741 = vunpack.c.l.b16 %v709
        %v742 = vunpack.c.l.b16 %v710
        %v743 = vunpack.c.l.b16 %v711
        %v744 = vunpack.c.l.b16 %v712
        %v745 = vunpack.c.l.b16 %v713
        %v746 = vunpack.c.l.b16 %v714
        %v747 = vunpack.c.l.b16 %v715
        %v748 = vunpack.c.l.b16 %v716
        %v749 = vunpack.c.l.b16 %v717
        %v750 = vunpack.c.l.b16 %v718
        %v751 = vunpack.c.l.b16 %v719
        %v752 = vunpack.c.l.b16 %v720
        %v753 = vunpack.c.l.b16 %v721
        %v754 = vunpack.c.l.b16 %v722
        %v755 = vunpack.c.l.b16 %v723
        %v756 = vpack.c.b16 %v741, %v740
        %v757 = vpack.c.b16 %v743, %v742
        %v758 = vpack.c.b16 %v745, %v744
        %v759 = vpack.c.b16 %v747, %v746
        %v760 = vpack.c.b16 %v749, %v748
        %v761 = vpack.c.b16 %v751, %v750
        %v762 = vpack.c.b16 %v753, %v752
        %v763 = vpack.c.b16 %v755, %v754
        %772 = vmatprep.subr.bf16.mxu0 0
        %773 = vmatpush1.bf16.msra.mxu0 %v763
        %774 = vmatprep.subr.bf16.mxu0 0
        %775 = vmatpush1.bf16.msra.mxu0 %v762
        %776 = vmatprep.subr.bf16.mxu0 0
        %777 = vmatpush1.bf16.msra.mxu0 %v761
        %778 = vmatprep.subr.bf16.mxu0 0
        %779 = vmatpush1.bf16.msra.mxu0 %v760
        %780 = vmatprep.subr.bf16.mxu0 0
        %781 = vmatpush1.bf16.msra.mxu0 %v759
        %782 = vmatprep.subr.bf16.mxu0 0
        %783 = vmatpush1.bf16.msra.mxu0 %v758
        %784 = vmatprep.subr.bf16.mxu0 0
        %785 = vmatpush1.bf16.msra.mxu0 %v757
        %786 = vmatprep.subr.bf16.mxu0 0
        %787 = vmatpush1.bf16.msra.mxu0 %v756
        %788 = vmatprep.subr.bf16.mxu0 0
        %789 = vmatpush2.bf16.msra.mxu0 0
        %790 = vmatprep.subr.bf16.mxu0 0
        %791 = vmatpush2.bf16.msra.mxu0 0
        %792 = vmatprep.subr.bf16.mxu0 0
        %793 = vmatpush2.bf16.msra.mxu0 0
        %794 = vmatprep.subr.bf16.mxu0 0
        %795 = vmatpush2.bf16.msra.mxu0 0
        %796 = vmatprep.subr.bf16.mxu0 0
        %797 = vmatpush2.bf16.msra.mxu0 0
        %798 = vmatprep.subr.bf16.mxu0 0
        %799 = vmatpush2.bf16.msra.mxu0 0
        %800 = vmatprep.subr.bf16.mxu0 0
        %801 = vmatpush2.bf16.msra.mxu0 0
        %802 = vmatprep.subr.bf16.mxu0 0
        %803 = vmatpush2.bf16.msra.mxu0 0
        %804 = vmatprep.mubr.bf16.mxu0 0
        %805 = vmatmul.mubr.bf16.gmra.mxu0 %v706
        %v806 = vpop.f32.mrf.mxu0
        %v807 = vadd.f32 0.0, %v806
        %v808 = vpop.f32.mrf.mxu0
        %v809 = vpop.f32.mrf.mxu0
        %v810 = vadd.f32 0.0, %v809
        %v811 = vpop.f32.mrf.mxu0
        %812 = vdwg.mxu0
        %v829 = vunpack.c.l.b16 %v688
        %v830 = vunpack.c.l.b16 %v689
        %v831 = vunpack.c.l.b16 %v690
        %v832 = vunpack.c.l.b16 %v691
        %v833 = vunpack.c.l.b16 %v692
        %v834 = vunpack.c.l.b16 %v693
        %v835 = vunpack.c.l.b16 %v694
        %v836 = vunpack.c.l.b16 %v695
        %v837 = vunpack.c.l.b16 %v696
        %v838 = vunpack.c.l.b16 %v697
        %v839 = vunpack.c.l.b16 %v698
        %v840 = vunpack.c.l.b16 %v699
        %v841 = vunpack.c.l.b16 %v700
        %v842 = vunpack.c.l.b16 %v701
        %v843 = vunpack.c.l.b16 %v702
        %v844 = vunpack.c.l.b16 %v703
        %v845 = vpack.c.b16 %v830, %v829
        %v846 = vpack.c.b16 %v832, %v831
        %v847 = vpack.c.b16 %v834, %v833
        %v848 = vpack.c.b16 %v836, %v835
        %v849 = vpack.c.b16 %v838, %v837
        %v850 = vpack.c.b16 %v840, %v839
        %v851 = vpack.c.b16 %v842, %v841
        %v852 = vpack.c.b16 %v844, %v843
        %861 = vmatprep.subr.bf16.mxu0 0
        %862 = vmatpush1.bf16.msra.mxu0 %v852
        %863 = vmatprep.subr.bf16.mxu0 0
        %864 = vmatpush1.bf16.msra.mxu0 %v851
        %865 = vmatprep.subr.bf16.mxu0 0
        %866 = vmatpush1.bf16.msra.mxu0 %v850
        %867 = vmatprep.subr.bf16.mxu0 0
        %868 = vmatpush1.bf16.msra.mxu0 %v849
        %869 = vmatprep.subr.bf16.mxu0 0
        %870 = vmatpush1.bf16.msra.mxu0 %v848
        %871 = vmatprep.subr.bf16.mxu0 0
        %872 = vmatpush1.bf16.msra.mxu0 %v847
        %873 = vmatprep.subr.bf16.mxu0 0
        %874 = vmatpush1.bf16.msra.mxu0 %v846
        %875 = vmatprep.subr.bf16.mxu0 0
        %876 = vmatpush1.bf16.msra.mxu0 %v845
        %877 = vmatprep.subr.bf16.mxu0 0
        %878 = vmatpush2.bf16.msra.mxu0 0
        %879 = vmatprep.subr.bf16.mxu0 0
        %880 = vmatpush2.bf16.msra.mxu0 0
        %881 = vmatprep.subr.bf16.mxu0 0
        %882 = vmatpush2.bf16.msra.mxu0 0
        %883 = vmatprep.subr.bf16.mxu0 0
        %884 = vmatpush2.bf16.msra.mxu0 0
        %885 = vmatprep.subr.bf16.mxu0 0
        %886 = vmatpush2.bf16.msra.mxu0 0
        %887 = vmatprep.subr.bf16.mxu0 0
        %888 = vmatpush2.bf16.msra.mxu0 0
        %889 = vmatprep.subr.bf16.mxu0 0
        %890 = vmatpush2.bf16.msra.mxu0 0
        %891 = vmatprep.subr.bf16.mxu0 0
        %892 = vmatpush2.bf16.msra.mxu0 0
        %893 = vmatprep.mubr.bf16.mxu0 0
        %894 = vmatmul.mubr.bf16.gmra.mxu0 %v687
        %v895 = vpop.f32.mrf.mxu0
        %v896 = vadd.f32 %v807, %v895
        %v897 = vpop.f32.mrf.mxu0
        %v898 = vpop.f32.mrf.mxu0
        %v899 = vadd.f32 %v810, %v898
        %v900 = vpop.f32.mrf.mxu0
        %901 = vdwg.mxu0
        %v902 = vld [vmem:[#allocation2 + $0x2] sm:$0xff]
        %v903 = vld [vmem:[#allocation2 + $0xa] sm:$0xff]
        %v904 = vpack.c.bf16 %v903, %v902
        %s905 = scalar_lea.vmem [#allocation8], 128
        %v906 = vld [vmem:[%s905] sm:$0xf]
        %v907 = vld [vmem:[%s905 + $0x4] sm:$0xf]
        %v908 = vld [vmem:[%s905 + $0x8] sm:$0xf]
        %v909 = vld [vmem:[%s905 + $0xc] sm:$0xf]
        %v910 = vld [vmem:[%s905 + $0x10] sm:$0xf]
        %v911 = vld [vmem:[%s905 + $0x14] sm:$0xf]
        %v912 = vld [vmem:[%s905 + $0x18] sm:$0xf]
        %v913 = vld [vmem:[%s905 + $0x1c] sm:$0xf]
        %v914 = vld [vmem:[%s905 + $0x20] sm:$0xf]
        %v915 = vld [vmem:[%s905 + $0x24] sm:$0xf]
        %v916 = vld [vmem:[%s905 + $0x28] sm:$0xf]
        %v917 = vld [vmem:[%s905 + $0x2c] sm:$0xf]
        %v918 = vld [vmem:[%s905 + $0x30] sm:$0xf]
        %v919 = vld [vmem:[%s905 + $0x34] sm:$0xf]
        %v920 = vld [vmem:[%s905 + $0x38] sm:$0xf]
        %v921 = vld [vmem:[%s905 + $0x3c] sm:$0xf]
        %v938 = vunpack.c.l.b16 %v906
        %v939 = vunpack.c.l.b16 %v907
        %v940 = vunpack.c.l.b16 %v908
        %v941 = vunpack.c.l.b16 %v909
        %v942 = vunpack.c.l.b16 %v910
        %v943 = vunpack.c.l.b16 %v911
        %v944 = vunpack.c.l.b16 %v912
        %v945 = vunpack.c.l.b16 %v913
        %v946 = vunpack.c.l.b16 %v914
        %v947 = vunpack.c.l.b16 %v915
        %v948 = vunpack.c.l.b16 %v916
        %v949 = vunpack.c.l.b16 %v917
        %v950 = vunpack.c.l.b16 %v918
        %v951 = vunpack.c.l.b16 %v919
        %v952 = vunpack.c.l.b16 %v920
        %v953 = vunpack.c.l.b16 %v921
        %v954 = vpack.c.b16 %v939, %v938
        %v955 = vpack.c.b16 %v941, %v940
        %v956 = vpack.c.b16 %v943, %v942
        %v957 = vpack.c.b16 %v945, %v944
        %v958 = vpack.c.b16 %v947, %v946
        %v959 = vpack.c.b16 %v949, %v948
        %v960 = vpack.c.b16 %v951, %v950
        %v961 = vpack.c.b16 %v953, %v952
        %970 = vmatprep.subr.bf16.mxu0 0
        %971 = vmatpush1.bf16.msra.mxu0 %v961
        %972 = vmatprep.subr.bf16.mxu0 0
        %973 = vmatpush1.bf16.msra.mxu0 %v960
        %974 = vmatprep.subr.bf16.mxu0 0
        %975 = vmatpush1.bf16.msra.mxu0 %v959
        %976 = vmatprep.subr.bf16.mxu0 0
        %977 = vmatpush1.bf16.msra.mxu0 %v958
        %978 = vmatprep.subr.bf16.mxu0 0
        %979 = vmatpush1.bf16.msra.mxu0 %v957
        %980 = vmatprep.subr.bf16.mxu0 0
        %981 = vmatpush1.bf16.msra.mxu0 %v956
        %982 = vmatprep.subr.bf16.mxu0 0
        %983 = vmatpush1.bf16.msra.mxu0 %v955
        %984 = vmatprep.subr.bf16.mxu0 0
        %985 = vmatpush1.bf16.msra.mxu0 %v954
        %986 = vmatprep.subr.bf16.mxu0 0
        %987 = vmatpush2.bf16.msra.mxu0 0
        %988 = vmatprep.subr.bf16.mxu0 0
        %989 = vmatpush2.bf16.msra.mxu0 0
        %990 = vmatprep.subr.bf16.mxu0 0
        %991 = vmatpush2.bf16.msra.mxu0 0
        %992 = vmatprep.subr.bf16.mxu0 0
        %993 = vmatpush2.bf16.msra.mxu0 0
        %994 = vmatprep.subr.bf16.mxu0 0
        %995 = vmatpush2.bf16.msra.mxu0 0
        %996 = vmatprep.subr.bf16.mxu0 0
        %997 = vmatpush2.bf16.msra.mxu0 0
        %998 = vmatprep.subr.bf16.mxu0 0
        %999 = vmatpush2.bf16.msra.mxu0 0
        %1000 = vmatprep.subr.bf16.mxu0 0
        %1001 = vmatpush2.bf16.msra.mxu0 0
        %1002 = vmatprep.mubr.bf16.mxu0 0
        %1003 = vmatmul.mubr.bf16.gmra.mxu0 %v904
        %v1004 = vpop.f32.mrf.mxu0
        %v1005 = vadd.f32 0.0, %v1004
        %v1006 = vpop.f32.mrf.mxu0
        %v1007 = vpop.f32.mrf.mxu0
        %v1008 = vadd.f32 0.0, %v1007
        %v1009 = vpop.f32.mrf.mxu0
        %1010 = vdwg.mxu0
        %v1011 = vadd.f32 %v896, %v1005
        %v1012 = vadd.f32 %v899, %v1008
        %v1014 = vlaneseq
        %v1015 = vshrl.u32 %v1014, 7
        %v1016 = vsub.s32 0, %v1015
        %v1017 = vrot.slane %v331, %v1016
        %v1019 = vmul.f32 %v1011, %v1017
        %v1020 = vmul.f32 %v1012, %v1017
        %v1022 = vlaneseq
        %v1023 = vshrl.u32 %v1022, 7
        %v1024 = vsub.s32 0, %v1023
        %v1025 = vrot.slane %v332, %v1024
        %v1027 = vadd.f32 %v1019, %v1025
        %v1028 = vadd.f32 %v1020, %v1025
        %v1029 = vadd.f32 %v1027, %v333
        %v1030 = vadd.f32 %v1028, %v334
        %v1031 = vmax.f32 %v1029, 0.0
        %v1032 = vmax.f32 %v1030, 0.0
        %1033 = vst [vmem:[%s325] sm:$0xff] %v1031
        %1034 = vst [vmem:[%s325 + $0x8] sm:$0xff] %v1032
        %s1035 = sand.u32 %s185, 1
        %s1036 = scalar_lea.sflag [#allocation5], %s1035
        %s1037 = sand.u32 %s185, 1
        %s1038 = smul.addr %s1037, 16
        %s1039 = scalar_lea.vmem [#allocation9], %s1038
        // Predicated region
        $region61: #{tpu_custom_call.1} parent=47 // pred_check
          %p1040 = pneg %p195
        $region62: #{tpu_custom_call.1} parent=47 // pred_check_branch
          %1042 = sbr.rel (%p1040) target = $region64
        $region63: #{tpu_custom_call.1} parent=47 // pred_region
          %s1044 = ssub.s32 256, 256
          %1045 = vsyncadd %s1036, %s1044
          %s1046 = smul.addr %s25, 2
          %s1047 = smul.addr %s1046, 128
          %s1048 = scalar_lea.hbm %s7, %s1047
          %s1049 = sshll.u32 %s1039, 4
          %s1050 = int_to_ptr.vmem [resolvable:$true] %s1049
          %1055 = dma.vmem_to_hbm [thread:$0]  %s1050, 256, %s1048, %s1036, 128, 128, 8
        $region64: #{tpu_custom_call.1} parent=47 // pred_fallthru
          _
      $region48: #{tpu_custom_call.1} parent=5 // pred_fallthru
        _
      %p1056 = scmp.le.s32.totalorder 2, %s20
      // Predicated region
      $region65: #{tpu_custom_call.1} parent=5 // pred_check
        %p1057 = pneg %p1056
      $region66: #{tpu_custom_call.1} parent=5 // pred_check_branch
        %1059 = sbr.rel (%p1057) target = $region68
      $region67: #{tpu_custom_call.1} parent=5 // pred_region
        %s1060 = ssub.s32 %s20, 2
        // Predicated region
        $region69: #{tpu_custom_call.1} parent=67 // pred_check
          %p1061 = pneg %p201
        $region70: #{tpu_custom_call.1} parent=67 // pred_check_branch
          %1063 = sbr.rel (%p1061) target = $region72
        $region71: #{tpu_custom_call.1} parent=67 // pred_region
          %s1064 = sand.u32 %s186, 1
          %s1065 = scalar_lea.sflag [#allocation5], %s1064
          %s1066 = sand.u32 %s186, 1
          %s1067 = smul.addr %s1066, 16
          %s1068 = scalar_lea.vmem [#allocation9], %s1067
          %1069 = dma.done %s1065, 256
        $region72: #{tpu_custom_call.1} parent=67 // pred_fallthru
          _
      $region68: #{tpu_custom_call.1} parent=5 // pred_fallthru
        _
    $region6: #{tpu_custom_call.1} parent=1 // loop_footer
      %s24 = sadd.s32 1, %s20
    $region7: #{tpu_custom_call.1} parent=1 // loop_footer_branch
      %19 = sbr.rel target = $region3
    $region8: #{tpu_custom_call.1} parent=1 // loop_exit
      _
    %1070 = vsyncpa [#allocation4], 1
    %s1071 = scalar_lea.sflag [#allocation4], 1
    %1072 = vsyncpa %s1071, 1
    %1073 = vsyncpa [#allocation7], 1
    %1074 = vsyncpa [#allocation5], 1
    %s1075 = scalar_lea.sflag [#allocation5], 1
    %1076 = vsyncpa %s1075, 1

</llo_original>
